<compile_context>
chip_gen: v7x
topology: tpu7x:2x2x1
jax: 0.10.0
libtpu: 0.0.40
codegen_flags: <defaults>
</compile_context>

<pallas_src>
import jax
import jax.numpy as jnp
from jax.experimental import pallas as pl
from jax.experimental.pallas import tpu as pltpu


LANES = 128            # vreg lane width; output stays lane-dense (unmasked vst)
MAX_TILE_ROWS = 4096   # 4096 * 128 * 4 B = 2 MiB/block; 4 buffers = 8 MiB VMEM


def _round_up(x, m):
    return ((x + m - 1) // m) * m


def _cdiv(a, b):
    return (a + b - 1) // b


def _linear_kernel(params_ref, x_ref, o_ref):
    # params_ref: SMEM (2,) f32 -> [weight, bias].
    # x_ref / o_ref: (tile_r, 128) lane-dense VMEM tiles.
    w = params_ref[0]
    b = params_ref[1]
    o_ref[...] = x_ref[...] * w + b   # pure VPU multiply-add (HBM-bandwidth bound)


def linear_forward(x, weight, bias):
    """y = x @ weight.T + bias for nn.Linear(in_features=1, out_features=1).

    x: (N, 1) f32, weight: (1, 1) f32, bias: (1,) f32 -> (N, 1) f32.
    """
    n = x.shape[0]
    x_flat = x.reshape(-1).astype(jnp.float32)            # free (metadata only)

    # Lane-align N.  When N % 128 == 0 this is a pure reshape: no pad, no extra
    # HBM pass.  Otherwise pad by < 128 elements (one extra pass, ragged N only).
    n_pad = _round_up(max(n, 1), LANES)
    padded = n_pad != n
    if padded:
        x_flat = jnp.pad(x_flat, (0, n_pad - n))
    rows = n_pad // LANES
    x_slab = x_flat.reshape(rows, LANES)                   # free (contiguous)

    # Row tiling: <= 2 MiB per block, sublane-aligned, and >= 2 grid steps when
    # there is enough work so both v7x TensorCores can be fed.  The last block
    # may be ragged; Pallas clips OOB rows (reads padded, writes dropped), so
    # `rows` is never rounded up to a tile multiple.
    min_steps = 2 if rows >= 16 else 1
    num_steps = max(_cdiv(rows, MAX_TILE_ROWS), min_steps)
    tile_r = _round_up(_cdiv(rows, num_steps), 8)
    grid = _cdiv(rows, tile_r)

    params = jnp.stack(
        [weight.reshape(()).astype(jnp.float32),
         bias.reshape(()).astype(jnp.float32)]
    )  # (2,) f32 scalars, lives in SMEM

    y_slab = pl.pallas_call(
        _linear_kernel,
        out_shape=jax.ShapeDtypeStruct((rows, LANES), jnp.float32),
        grid_spec=pltpu.PrefetchScalarGridSpec(
            num_scalar_prefetch=0,
            grid=(grid,),
            in_specs=[
                pl.BlockSpec(memory_space=pltpu.MemorySpace.SMEM),   # [w, b]
                pl.BlockSpec((tile_r, LANES), lambda i: (i, 0)),     # x tile
            ],
            out_specs=pl.BlockSpec((tile_r, LANES), lambda i: (i, 0)),
        ),
        compiler_params=pltpu.CompilerParams(
            # TODO(synk): on v7x, pltpu.CORE_PARALLEL on this axis is what
            # actually shards tiles across both TensorCores; "parallel" kept
            # here for cross-generation compile safety.
            dimension_semantics=("parallel",),
        ),
        cost_estimate=pl.CostEstimate(
            flops=2 * n_pad, transcendentals=0, bytes_accessed=8 * n_pad + 8),
    )(params, x_slab)

    y_flat = y_slab.reshape(-1)                            # free
    if padded:
        y_flat = y_flat[:n]                                # ragged-N path only
    return y_flat.reshape(n, 1)


if __name__ == "__main__":
    key = jax.random.PRNGKey(0)
    kx, kw, kb = jax.random.split(key, 3)

    weight = jax.random.uniform(kw, (1, 1), minval=-1.0, maxval=1.0, dtype=jnp.float32)
    bias = jax.random.uniform(kb, (1,), minval=-1.0, maxval=1.0, dtype=jnp.float32)

    # Primary small case consistent with nn.Linear(1, 1): batch=8, feature=1.
    x = jax.random.normal(kx, (8, 1), dtype=jnp.float32)
    y = linear_forward(x, weight, bias)
    jax.block_until_ready(y)
    y_ref = x @ weight.T + bias
    assert y.shape == y_ref.shape
    assert jnp.allclose(y, y_ref, atol=1e-6), "mismatch vs reference (N=8)"

    # Lane-aligned N: zero-copy path (no pad, no slice), 2-step grid.
    x_al = jax.random.normal(kx, (2048, 1), dtype=jnp.float32)
    y_al = linear_forward(x_al, weight, bias)
    jax.block_until_ready(y_al)
    assert jnp.allclose(y_al, x_al @ weight.T + bias, atol=1e-6), "mismatch (aligned N)"

    # Ragged N: <128-element pad, multi-step grid with a clipped last block.
    x_rg = jax.random.normal(kx, (3333, 1), dtype=jnp.float32)
    y_rg = linear_forward(x_rg, weight, bias)
    jax.block_until_ready(y_rg)
    assert jnp.allclose(y_rg, x_rg @ weight.T + bias, atol=1e-6), "mismatch (ragged N)"

    print("KERNEL_OK")
</pallas_src>

<mosaic_0001>
module attributes {stable_mosaic.version = 11 : i64} {
  func.func @_linear_kernel(%arg0: i32, %arg1: memref<2xf32, #tpu.memory_space<smem>>, %arg2: memref<8x128xf32, #tpu.memory_space<vmem>>, %arg3: memref<8x128xf32, #tpu.memory_space<vmem>>) attributes {dimension_semantics = [#tpu.dimension_semantics<parallel>], iteration_bounds = array<i64: 1>, scalar_prefetch = 0 : i64, scratch_operands = 0 : i64, tpu.core_type = #tpu.core_type<tc>, window_params = [{transform_indices = @transform_0, window_bounds = array<i64: 2>}, {transform_indices = @transform_1, window_bounds = array<i64: 8, 128>}, {transform_indices = @transform_2, window_bounds = array<i64: 8, 128>}]} {
    %c0 = arith.constant 0 : index
    %0 = memref.load %arg1[%c0] : memref<2xf32, #tpu.memory_space<smem>>
    %c1 = arith.constant 1 : index
    %1 = memref.load %arg1[%c1] : memref<2xf32, #tpu.memory_space<smem>>
    %c0_0 = arith.constant 0 : index
    %c0_1 = arith.constant 0 : index
    %2 = vector.load %arg2[%c0_0, %c0_1] : memref<8x128xf32, #tpu.memory_space<vmem>>, vector<8x128xf32>
    %3 = vector.broadcast %0 : f32 to vector<8x128xf32>
    %4 = arith.mulf %2, %3 : vector<8x128xf32>
    %5 = vector.broadcast %1 : f32 to vector<8x128xf32>
    %6 = arith.addf %4, %5 : vector<8x128xf32>
    %c0_2 = arith.constant 0 : index
    %c0_3 = arith.constant 0 : index
    %7 = vector.load %arg3[%c0_2, %c0_3] : memref<8x128xf32, #tpu.memory_space<vmem>>, vector<8x128xf32>
    tpu.vector_store %arg3[%c0_2, %c0_3], %6 {strides = array<i32>} : memref<8x128xf32, #tpu.memory_space<vmem>>, vector<8x128xf32>,
    return
  }
  func.func @transform_0(%arg0: i32) -> i32 {
    %c0_i32 = arith.constant 0 : i32
    %c0_i32_0 = arith.constant 0 : i32
    return %c0_i32 : i32
  }
  func.func @transform_1(%arg0: i32) -> (i32, i32) {
    %c0_i32 = arith.constant 0 : i32
    %c0_i32_0 = arith.constant 0 : i32
    return %arg0, %c0_i32 : i32, i32
  }
  func.func @transform_2(%arg0: i32) -> (i32, i32) {
    %c0_i32 = arith.constant 0 : i32
    %c0_i32_0 = arith.constant 0 : i32
    return %arg0, %c0_i32 : i32, i32
  }
}

</mosaic_0001>

<llo_original>
// kernel: tpu_custom_call.1
$region0: #{tpu_custom_call.1}
  #allocation0 [shape = 'u32[]', space=smem, size = 0x4, offset = 0x4, fixed_abs, tag = 'smem constant byte address 0x4 - core index']
  #allocation1 [shape = 'u32[144,128]{1,0:T(1,128)}', space=vmem, size = 0x12000, scoped, tag = 'internal scratch']
  %s0 = inlined_call_operand.hbm [shape: f32[2], index: 0, kind: input, shape index: {}]
  %s1 = inlined_call_operand.vmem [shape: f32[1,128], index: 1, kind: input, shape index: {}]
  %s2 = inlined_call_operand.hbm [shape: f32[1,128], index: 2, kind: output, shape index: {}]
  %s3 = sld [smem:[#allocation0]]
  $region22: #{tpu_custom_call.1} parent=0
    _
  %s5 = ssub.s32 1, %s3
  %s6 = scalar_select 0, %s5, %s3
  $region1: #{tpu_custom_call.1} parent=0
    #allocation2 [shape = 'u8[512]{0}', space=smem, size = 0x200, scoped, tag = 'input window, operand 0, single buffered']
    #allocation3 [shape = 's32[1]{0}', space=sflag, size = 0x4, scoped, tag = 'scoped memory for tpu_custom_call.1']
    #allocation4 [shape = 's32[1]{0}', space=sflag, size = 0x4, scoped, tag = 'scoped memory for tpu_custom_call.1']
    #allocation5 [shape = 'u8[4096]{0}', space=vmem, size = 0x1000, scoped, tag = 'output window, operand 0, single buffered']
    %7 = vsyncpa [#allocation4], 0
    %8 = vsyncpa [#allocation3], 0
    // Predicated region
    $region2: #{tpu_custom_call.1} parent=1 // pred_check
      _
    $region3: #{tpu_custom_call.1} parent=1 // pred_check_branch
      %10 = sbr.rel (0) target = $region5
    $region4: #{tpu_custom_call.1} parent=1 // pred_region
      %s12 = ssub.s32 16, 16
      %13 = vsyncadd [#allocation4], %s12
      %16 = dma.hbm_to_smem %s0, 16, [#allocation2], [#allocation4]
    $region5: #{tpu_custom_call.1} parent=1 // pred_fallthru
      _
    // Predicated region
    $region6: #{tpu_custom_call.1} parent=1 // pred_check
      _
    $region7: #{tpu_custom_call.1} parent=1 // pred_check_branch
      %18 = sbr.rel (0) target = $region9
    $region8: #{tpu_custom_call.1} parent=1 // pred_region
      _
    $region9: #{tpu_custom_call.1} parent=1 // pred_fallthru
      _
    // Predicated region
    $region10: #{tpu_custom_call.1} parent=1 // pred_check
      _
    $region11: #{tpu_custom_call.1} parent=1 // pred_check_branch
      %20 = sbr.rel (0) target = $region13
    $region12: #{tpu_custom_call.1} parent=1 // pred_region
      %21 = dma.done [#allocation4], 16
    $region13: #{tpu_custom_call.1} parent=1 // pred_fallthru
      _
    %22 = sfence
    %s23 = sld [smem:[#allocation2]]
    %s24 = sld [smem:[#allocation2 + $0x1]]
    %v25 = vld [vmem:[%s1] sm:$0xff]
    %v26 = vstv %s23
    %v27 = vmul.f32 %v25, %v26
    %v28 = vstv %s24
    %v29 = vadd.f32 %v27, %v28
    %30 = vst [vmem:[#allocation5] sm:$0xff] %v29
    // Predicated region
    $region14: #{tpu_custom_call.1} parent=1 // pred_check
      _
    $region15: #{tpu_custom_call.1} parent=1 // pred_check_branch
      %32 = sbr.rel (0) target = $region17
    $region16: #{tpu_custom_call.1} parent=1 // pred_region
      %s34 = ssub.s32 128, 16
      %35 = vsyncadd [#allocation3], %s34
      %s36 = sshll.u32 [#allocation5], 4
      %s37 = int_to_ptr.vmem [resolvable:$true] %s36
      %42 = dma.vmem_to_hbm [thread:$0]  %s37, 16, %s2, [#allocation3], 16, 16, 1
    $region17: #{tpu_custom_call.1} parent=1 // pred_fallthru
      _
    // Predicated region
    $region18: #{tpu_custom_call.1} parent=1 // pred_check
      _
    $region19: #{tpu_custom_call.1} parent=1 // pred_check_branch
      %44 = sbr.rel (0) target = $region21
    $region20: #{tpu_custom_call.1} parent=1 // pred_region
      %45 = dma.done [#allocation3], 128
    $region21: #{tpu_custom_call.1} parent=1 // pred_fallthru
      _
    %46 = vsyncpa [#allocation3], 1
    %47 = vsyncpa [#allocation4], 1

</llo_original>
